<compile_context>
chip_gen: v7x
topology: tpu7x:2x2x1
jax: 0.10.0
libtpu: 0.0.40
codegen_flags: <defaults>
</compile_context>

<pallas_src>
import functools

import jax
import jax.numpy as jnp
import numpy as np
from jax.experimental import pallas as pl
from jax.experimental.pallas import tpu as pltpu


def _pick_time_chunk(seq_len, max_chunk=64):
    """Largest divisor of seq_len <= max_chunk, preferring multiples of 8.

    The chunk bounds the static unroll of the in-kernel recurrence loop and
    sets the matmul M = B * chunk (bigger amortizes the per-grid-step cost).
    """
    best = None
    for c in range(min(seq_len, max_chunk), 0, -1):
        if seq_len % c == 0:
            if c % 8 == 0:
                return c
            if best is None:
                best = c
    return best if best is not None else seq_len


def _vmem_limit_bytes(bsz, chunk, d, hidden):
    """Explicit VMEM budget; None when the default scoped limit is plenty."""
    h3 = 3 * hidden
    need = (2 * bsz * chunk * d * 4          # double-buffered x blocks (f32)
            + 2 * d * h3 * 2                 # resident bf16 fused weight
            + 2 * h3 * 4                     # resident bias
            + 2 * bsz * chunk * hidden * 4   # double-buffered output blocks
            + bsz * chunk * h3 * 4           # gate slab scratch
            + bsz * hidden * 4)              # h carry
    need = 2 * need                          # headroom for in-kernel temporaries
    if need <= 24 * 1024 * 1024:
        return None                          # default scoped limit suffices
    return min(64 * 1024 * 1024, max(need, 48 * 1024 * 1024))


# ---------------------------------------------------------------------------
# Fused kernel: norm + quant + ternary matmul + gates + recurrence.
# ---------------------------------------------------------------------------
def _mlgru_fused_kernel(x_ref, w_ref, b_ref, o_ref, h_ref, gates_ref, *,
                        eps, hidden, chunk):
    bsz, tchunk, d = x_ref.shape
    h3 = 3 * hidden

    @pl.when(pl.program_id(0) == 0)
    def _():
        h_ref[...] = jnp.zeros_like(h_ref)

    x = x_ref[...].astype(jnp.float32)                        # (B, Tc, D)

    # rms_norm (RMSNormFunction.forward): mean-centred, population variance.
    mean = jnp.mean(x, axis=-1, keepdims=True)
    xc = x - mean
    var = jnp.mean(xc * xc, axis=-1, keepdims=True)
    r = jax.lax.rsqrt(jnp.maximum(var + eps, 1e-10))          # EUP rsqrt
    y = r * xc

    # activation_quant: per-timestep amax over the whole (B, D) slice, exactly
    # like the PyTorch loop which quantizes x[:, t, :] as one tensor.
    y = jnp.where(jnp.isnan(y), 0.0, y)
    amax = jnp.max(jnp.abs(y), axis=-1, keepdims=True)        # (B, Tc, 1)
    amax = jnp.max(amax, axis=0, keepdims=True)                # (1, Tc, 1)
    scale = jnp.where((amax == 0.0) | jnp.isnan(amax), 1.0, amax / 127.0)
    y_int = jnp.clip(jnp.round(y / scale), -128.0, 127.0)      # exact integers

    # Fused ternary linear for all 3 gates and all Tc timesteps in ONE
    # native-rate bf16 MXU matmul: integer activations (exact in bf16) times
    # {+/-1, 0} weights (exact in bf16), f32 accumulation.  The per-timestep
    # scale and the bias are applied to the f32 accumulator AFTER the dot,
    # which is mathematically identical to the reference ordering.
    acts = jnp.dot(y_int.astype(jnp.bfloat16).reshape(bsz * tchunk, d),
                   w_ref[...], preferred_element_type=jnp.float32)
    acts = acts.reshape(bsz, tchunk, h3) * scale + b_ref[...]

    # Gate nonlinearities: one sigmoid over the whole (B, Tc, 3H) slab (EUP),
    # then cheap lane-slice arithmetic.  The recurrence below only needs
    # sig_f, (1 - sig_f) * silu_c and sig_g, stored as a single VMEM slab.
    sig = jax.nn.sigmoid(acts)
    f_gate = sig[..., :hidden]
    c_term = (1.0 - f_gate) * (acts[..., hidden:2 * hidden]
                               * sig[..., hidden:2 * hidden])
    g_gate = sig[..., 2 * hidden:]
    gates_ref[...] = jnp.concatenate([f_gate, c_term, g_gate], axis=-1)

    # Sequential recurrence over the chunk (mul/add only).  Each step loads
    # its (B, 3H) gate row from the VMEM slab right before use, so live
    # ranges stay short and the static unroll (chunk <= 64) is
    # register-friendly.
    # TODO(synk): time-major (Tc, B, 3H) slab + lax.fori_loop would turn the
    # per-step sublane-masked loads into full-tile accesses.
    h = h_ref[...]                                             # (B, H) f32
    for t in range(chunk):
        fcg = gates_ref[:, t, :]                               # (B, 3H)
        f = fcg[:, :hidden]
        c = fcg[:, hidden:2 * hidden]
        g = fcg[:, 2 * hidden:]
        h = f * h + c
        o_ref[:, t, :] = (h * g).astype(o_ref.dtype)
    h_ref[...] = h                                             # carry to next chunk


# ---------------------------------------------------------------------------
# Wrapper
# ---------------------------------------------------------------------------
def prepare_ternary_weights(W_f, W_c, W_g, b_f, b_c, b_g):
    """One-time weight prep: ternarize + transpose + fuse the 3 gates.

    bf16 is exact for {-1, 0, +1}; it halves the resident weight VMEM and
    enables the native-rate MXU path.
    """
    w_fused = jnp.concatenate(
        [jnp.sign(W_f).T, jnp.sign(W_c).T, jnp.sign(W_g).T], axis=1
    ).astype(jnp.bfloat16)                                     # (D, 3H)
    b_fused = jnp.concatenate([b_f, b_c, b_g]).reshape(1, -1).astype(jnp.float32)
    return w_fused, b_fused


def mlgru_layer_forward(x, W_f, W_c, W_g, b_f, b_c, b_g, eps=1e-8,
                        time_chunk=None):
    """x: (batch, seq, input_size); W_*: (input_size, hidden_size)."""
    bsz, seq, d = x.shape
    hidden = W_f.shape[1]
    # Like the PyTorch module (input_q.matmul(weight_q.t())), the math only
    # type-checks when input_size == hidden_size.
    assert d == W_f.shape[0] and d == hidden
    w_fused, b_fused = prepare_ternary_weights(W_f, W_c, W_g, b_f, b_c, b_g)

    tc = time_chunk if time_chunk is not None else _pick_time_chunk(seq)
    assert seq % tc == 0
    n_chunks = seq // tc
    h3 = 3 * hidden

    cp_kwargs = dict(dimension_semantics=("arbitrary",))   # sequential h carry
    vmem_limit = _vmem_limit_bytes(bsz, tc, d, hidden)
    if vmem_limit is not None:
        cp_kwargs["vmem_limit_bytes"] = vmem_limit

    return pl.pallas_call(
        functools.partial(_mlgru_fused_kernel, eps=eps, hidden=hidden, chunk=tc),
        out_shape=jax.ShapeDtypeStruct((bsz, seq, hidden), x.dtype),
        grid_spec=pltpu.PrefetchScalarGridSpec(
            num_scalar_prefetch=0,
            grid=(n_chunks,),
            in_specs=[
                pl.BlockSpec((bsz, tc, d), lambda t: (0, t, 0)),
                pl.BlockSpec((d, h3), lambda t: (0, 0)),       # resident weights
                pl.BlockSpec((1, h3), lambda t: (0, 0)),       # resident bias
            ],
            out_specs=pl.BlockSpec((bsz, tc, hidden), lambda t: (0, t, 0)),
            scratch_shapes=[
                pltpu.VMEM((bsz, hidden), jnp.float32),        # h carry
                pltpu.VMEM((bsz, tc, h3), jnp.float32),        # gate slab
            ],
        ),
        compiler_params=pltpu.CompilerParams(**cp_kwargs),
    )(x, w_fused, b_fused)


# ---------------- pure-JAX reference (for correctness checks) ---------------
def _activation_quant_ref(y, bits=8):
    qmin = -(2 ** (bits - 1))
    qmax = 2 ** (bits - 1) - 1
    y = jnp.where(jnp.isnan(y), 0.0, y)
    amax = jnp.max(jnp.abs(y))
    scale = jnp.where((amax == 0.0) | jnp.isnan(amax), 1.0, amax / qmax)
    return jnp.clip(jnp.round(y / scale), qmin, qmax) * scale


def _reference(x, W_f, W_c, W_g, b_f, b_c, b_g, eps=1e-8):
    B, S, D = x.shape
    H = W_f.shape[1]
    hi = jax.lax.Precision.HIGHEST
    wf, wc, wg = jnp.sign(W_f).T, jnp.sign(W_c).T, jnp.sign(W_g).T

    def rms(xt):
        mean = jnp.mean(xt, axis=-1, keepdims=True)
        var = jnp.mean((xt - mean) ** 2, axis=-1, keepdims=True)
        r = 1.0 / jnp.sqrt(jnp.maximum(var + eps, 1e-10))
        return r * (xt - mean)

    def step(h, x_t):
        y = _activation_quant_ref(rms(x_t))
        f_lin = jnp.dot(y, wf, precision=hi) + b_f
        c_lin = jnp.dot(y, wc, precision=hi) + b_c
        g_lin = jnp.dot(y, wg, precision=hi) + b_g
        sig_f = jax.nn.sigmoid(f_lin)
        silu_c = c_lin * jax.nn.sigmoid(c_lin)
        sig_g = jax.nn.sigmoid(g_lin)
        h_new = sig_f * h + (1.0 - sig_f) * silu_c
        return h_new, h_new * sig_g

    h0 = jnp.zeros((B, H), jnp.float32)
    _, outs = jax.lax.scan(step, h0, jnp.transpose(x, (1, 0, 2)))
    return jnp.transpose(outs, (1, 0, 2))


if __name__ == "__main__":
    key = jax.random.PRNGKey(0)
    B, S, D = 4, 8, 32          # batch, seq, input_size == hidden_size
    H = D

    k = jax.random.split(key, 7)
    x = jax.random.normal(k[0], (B, S, D), jnp.float32)
    W_f = jax.random.normal(k[1], (D, H), jnp.float32)
    W_c = jax.random.normal(k[2], (D, H), jnp.float32)
    W_g = jax.random.normal(k[3], (D, H), jnp.float32)
    b_f = jax.random.normal(k[4], (H,), jnp.float32)
    b_c = jax.random.normal(k[5], (H,), jnp.float32)
    b_g = jax.random.normal(k[6], (H,), jnp.float32)

    fwd = jax.jit(mlgru_layer_forward)
    out = jax.block_until_ready(fwd(x, W_f, W_c, W_g, b_f, b_c, b_g))
    ref = jax.block_until_ready(_reference(x, W_f, W_c, W_g, b_f, b_c, b_g))
    np.testing.assert_allclose(np.asarray(out), np.asarray(ref),
                               rtol=1e-5, atol=1e-5)

    # Multi-chunk path (2 sequential grid steps of 8 timesteps): validates the
    # h carry across grid iterations end-to-end against the pure-JAX scan.
    x2 = jax.random.normal(jax.random.PRNGKey(1), (B, 16, D), jnp.float32)
    out2 = jax.block_until_ready(
        mlgru_layer_forward(x2, W_f, W_c, W_g, b_f, b_c, b_g, time_chunk=8))
    ref2 = jax.block_until_ready(_reference(x2, W_f, W_c, W_g, b_f, b_c, b_g))
    np.testing.assert_allclose(np.asarray(out2), np.asarray(ref2),
                               rtol=1e-5, atol=1e-5)

    print("KERNEL_OK")
</pallas_src>

<mosaic_0001>
module attributes {stable_mosaic.version = 11 : i64} {
  func.func @_mlgru_fused_kernel(%arg0: i32, %arg1: memref<4x8x32xf32, #tpu.memory_space<vmem>>, %arg2: memref<32x96xbf16, #tpu.memory_space<vmem>>, %arg3: memref<1x96xf32, #tpu.memory_space<vmem>>, %arg4: memref<4x8x32xf32, #tpu.memory_space<vmem>>, %arg5: memref<4x32xf32, #tpu.memory_space<vmem>>, %arg6: memref<4x8x96xf32, #tpu.memory_space<vmem>>) attributes {dimension_semantics = [#tpu.dimension_semantics<arbitrary>], iteration_bounds = array<i64: 1>, scalar_prefetch = 0 : i64, scratch_operands = 2 : i64, tpu.core_type = #tpu.core_type<tc>, window_params = [{transform_indices = @transform_0, window_bounds = array<i64: 4, 8, 32>}, {pipeline_mode = #tpu.pipeline_mode<synchronous>, transform_indices = @transform_1, window_bounds = array<i64: 32, 96>}, {pipeline_mode = #tpu.pipeline_mode<synchronous>, transform_indices = @transform_2, window_bounds = array<i64: 1, 96>}, {transform_indices = @transform_3, window_bounds = array<i64: 4, 8, 32>}]} {
    %c0_i32 = arith.constant 0 : i32
    %0 = arith.cmpi eq, %arg0, %c0_i32 : i32
    %1 = arith.extui %0 : i1 to i32
    %c0_i32_0 = arith.constant 0 : i32
    %2 = arith.cmpi ne, %1, %c0_i32_0 : i32
    scf.if %2 {
      %cst_71 = arith.constant 0.000000e+00 : f32
      %161 = vector.broadcast %cst_71 : f32 to vector<4x32xf32>
      %c0_72 = arith.constant 0 : index
      %c0_73 = arith.constant 0 : index
      %162 = vector.load %arg5[%c0_72, %c0_73] : memref<4x32xf32, #tpu.memory_space<vmem>>, vector<4x32xf32>
      tpu.vector_store %arg5[%c0_72, %c0_73], %161 {strides = array<i32>} : memref<4x32xf32, #tpu.memory_space<vmem>>, vector<4x32xf32>,
    } else {
    }
    %c0 = arith.constant 0 : index
    %c0_1 = arith.constant 0 : index
    %c0_2 = arith.constant 0 : index
    %3 = vector.load %arg1[%c0, %c0_1, %c0_2] : memref<4x8x32xf32, #tpu.memory_space<vmem>>, vector<4x8x32xf32>
    %cst = arith.constant dense<0.000000e+00> : vector<4x8xf32>
    %4 = vector.multi_reduction <add>, %3, %cst [2] : vector<4x8x32xf32> to vector<4x8xf32>
    %5 = vector.shape_cast %4 : vector<4x8xf32> to vector<4x8x1xf32>
    %cst_3 = arith.constant 3.200000e+01 : f32
    %6 = vector.broadcast %cst_3 : f32 to vector<4x8x1xf32>
    %7 = arith.divf %5, %6 : vector<4x8x1xf32>
    %8 = vector.broadcast %7 : vector<4x8x1xf32> to vector<4x8x32xf32>
    %9 = arith.subf %3, %8 : vector<4x8x32xf32>
    %10 = arith.mulf %9, %9 : vector<4x8x32xf32>
    %cst_4 = arith.constant dense<0.000000e+00> : vector<4x8xf32>
    %11 = vector.multi_reduction <add>, %10, %cst_4 [2] : vector<4x8x32xf32> to vector<4x8xf32>
    %12 = vector.shape_cast %11 : vector<4x8xf32> to vector<4x8x1xf32>
    %cst_5 = arith.constant 3.200000e+01 : f32
    %13 = vector.broadcast %cst_5 : f32 to vector<4x8x1xf32>
    %14 = arith.divf %12, %13 : vector<4x8x1xf32>
    %cst_6 = arith.constant 9.99999993E-9 : f32
    %15 = vector.broadcast %cst_6 : f32 to vector<4x8x1xf32>
    %16 = arith.addf %14, %15 : vector<4x8x1xf32>
    %cst_7 = arith.constant 1.000000e-10 : f32
    %17 = vector.broadcast %cst_7 : f32 to vector<4x8x1xf32>
    %18 = arith.maximumf %16, %17 : vector<4x8x1xf32>
    %19 = math.rsqrt %18 : vector<4x8x1xf32>
    %20 = vector.broadcast %19 : vector<4x8x1xf32> to vector<4x8x32xf32>
    %21 = arith.mulf %20, %9 : vector<4x8x32xf32>
    %22 = arith.cmpf one, %21, %21 : vector<4x8x32xf32>
    %cst_8 = arith.constant 0.000000e+00 : f32
    %23 = vector.broadcast %cst_8 : f32 to vector<4x8x32xf32>
    %24 = arith.select %22, %23, %21 : vector<4x8x32xi1>, vector<4x8x32xf32>
    %25 = math.absf %24 : vector<4x8x32xf32>
    %cst_9 = arith.constant dense<0xFF800000> : vector<4x8xf32>
    %26 = vector.multi_reduction <maximumf>, %25, %cst_9 [2] : vector<4x8x32xf32> to vector<4x8xf32>
    %27 = vector.shape_cast %26 : vector<4x8xf32> to vector<4x8x1xf32>
    %cst_10 = arith.constant dense<0xFF800000> : vector<8x1xf32>
    %28 = vector.multi_reduction <maximumf>, %27, %cst_10 [0] : vector<4x8x1xf32> to vector<8x1xf32>
    %29 = vector.shape_cast %28 : vector<8x1xf32> to vector<1x8x1xf32>
    %cst_11 = arith.constant 0.000000e+00 : f32
    %30 = vector.broadcast %cst_11 : f32 to vector<1x8x1xf32>
    %31 = arith.cmpf oeq, %29, %30 : vector<1x8x1xf32>
    %32 = arith.cmpf one, %29, %29 : vector<1x8x1xf32>
    %33 = arith.ori %31, %32 : vector<1x8x1xi1>
    %cst_12 = arith.constant 1.270000e+02 : f32
    %34 = vector.broadcast %cst_12 : f32 to vector<1x8x1xf32>
    %35 = arith.divf %29, %34 : vector<1x8x1xf32>
    %cst_13 = arith.constant 1.000000e+00 : f32
    %36 = vector.broadcast %cst_13 : f32 to vector<1x8x1xf32>
    %37 = arith.select %33, %36, %35 : vector<1x8x1xi1>, vector<1x8x1xf32>
    %38 = vector.broadcast %37 : vector<1x8x1xf32> to vector<4x8x32xf32>
    %39 = arith.divf %24, %38 : vector<4x8x32xf32>
    %40 = math.roundeven %39 : vector<4x8x32xf32>
    %cst_14 = arith.constant -1.280000e+02 : f32
    %cst_15 = arith.constant 1.270000e+02 : f32
    %41 = vector.broadcast %cst_14 : f32 to vector<4x8x32xf32>
    %42 = arith.maximumf %41, %40 : vector<4x8x32xf32>
    %43 = vector.broadcast %cst_15 : f32 to vector<4x8x32xf32>
    %44 = arith.minimumf %43, %42 : vector<4x8x32xf32>
    %45 = arith.truncf %44 : vector<4x8x32xf32> to vector<4x8x32xbf16>
    %46 = vector.shape_cast %45 : vector<4x8x32xbf16> to vector<32x32xbf16>
    %c0_16 = arith.constant 0 : index
    %c0_17 = arith.constant 0 : index
    %47 = vector.load %arg2[%c0_16, %c0_17] : memref<32x96xbf16, #tpu.memory_space<vmem>>, vector<32x96xbf16>
    %cst_18 = arith.constant dense<0.000000e+00> : vector<32x96xf32>
    %48 = tpu.matmul %46, %47, %cst_18 {dimension_numbers = #tpu.dot_dimension_numbers<[1], [0], [0], [1], [0, 0, 1, 1], [], []>} : vector<32x32xbf16>, vector<32x96xbf16>, vector<32x96xf32> -> vector<32x96xf32>
    %49 = vector.shape_cast %48 : vector<32x96xf32> to vector<4x8x96xf32>
    %50 = vector.broadcast %37 : vector<1x8x1xf32> to vector<4x8x96xf32>
    %51 = arith.mulf %49, %50 : vector<4x8x96xf32>
    %c0_19 = arith.constant 0 : index
    %c0_20 = arith.constant 0 : index
    %52 = vector.load %arg3[%c0_19, %c0_20] : memref<1x96xf32, #tpu.memory_space<vmem>>, vector<1x96xf32>
    %53 = vector.shape_cast %52 : vector<1x96xf32> to vector<1x1x96xf32>
    %54 = vector.broadcast %53 : vector<1x1x96xf32> to vector<4x8x96xf32>
    %55 = arith.addf %51, %54 : vector<4x8x96xf32>
    %56 = arith.negf %55 : vector<4x8x96xf32>
    %57 = math.exp %56 : vector<4x8x96xf32>
    %cst_21 = arith.constant 1.000000e+00 : f32
    %58 = vector.broadcast %cst_21 : f32 to vector<4x8x96xf32>
    %59 = arith.addf %58, %57 : vector<4x8x96xf32>
    %60 = arith.divf %58, %59 : vector<4x8x96xf32>
    %61 = vector.extract_strided_slice %60 {offsets = [0, 0, 0], sizes = [4, 8, 32], strides = [1, 1, 1]} : vector<4x8x96xf32> to vector<4x8x32xf32>
    %cst_22 = arith.constant 1.000000e+00 : f32
    %62 = vector.broadcast %cst_22 : f32 to vector<4x8x32xf32>
    %63 = arith.subf %62, %61 : vector<4x8x32xf32>
    %64 = vector.extract_strided_slice %55 {offsets = [0, 0, 32], sizes = [4, 8, 32], strides = [1, 1, 1]} : vector<4x8x96xf32> to vector<4x8x32xf32>
    %65 = vector.extract_strided_slice %60 {offsets = [0, 0, 32], sizes = [4, 8, 32], strides = [1, 1, 1]} : vector<4x8x96xf32> to vector<4x8x32xf32>
    %66 = arith.mulf %64, %65 : vector<4x8x32xf32>
    %67 = arith.mulf %63, %66 : vector<4x8x32xf32>
    %68 = vector.extract_strided_slice %60 {offsets = [0, 0, 64], sizes = [4, 8, 32], strides = [1, 1, 1]} : vector<4x8x96xf32> to vector<4x8x32xf32>
    %69 = tpu.concatenate %61, %67, %68 in 2 : vector<4x8x32xf32>, vector<4x8x32xf32>, vector<4x8x32xf32> -> vector<4x8x96xf32>
    %c0_23 = arith.constant 0 : index
    %c0_24 = arith.constant 0 : index
    %c0_25 = arith.constant 0 : index
    %70 = vector.load %arg6[%c0_23, %c0_24, %c0_25] : memref<4x8x96xf32, #tpu.memory_space<vmem>>, vector<4x8x96xf32>
    tpu.vector_store %arg6[%c0_23, %c0_24, %c0_25], %69 {strides = array<i32>} : memref<4x8x96xf32, #tpu.memory_space<vmem>>, vector<4x8x96xf32>,
    %c0_26 = arith.constant 0 : index
    %c0_27 = arith.constant 0 : index
    %71 = vector.load %arg5[%c0_26, %c0_27] : memref<4x32xf32, #tpu.memory_space<vmem>>, vector<4x32xf32>
    %c0_28 = arith.constant 0 : index
    %c0_29 = arith.constant 0 : index
    %c0_30 = arith.constant 0 : index
    %72 = vector.load %arg6[%c0_28, %c0_29, %c0_30] : memref<4x8x96xf32, #tpu.memory_space<vmem>>, vector<4x1x96xf32>
    %73 = vector.shape_cast %72 : vector<4x1x96xf32> to vector<4x96xf32>
    %74 = vector.extract_strided_slice %73 {offsets = [0, 0], sizes = [4, 32], strides = [1, 1]} : vector<4x96xf32> to vector<4x32xf32>
    %75 = vector.extract_strided_slice %73 {offsets = [0, 32], sizes = [4, 32], strides = [1, 1]} : vector<4x96xf32> to vector<4x32xf32>
    %76 = vector.extract_strided_slice %73 {offsets = [0, 64], sizes = [4, 32], strides = [1, 1]} : vector<4x96xf32> to vector<4x32xf32>
    %77 = arith.mulf %74, %71 : vector<4x32xf32>
    %78 = arith.addf %77, %75 : vector<4x32xf32>
    %79 = arith.mulf %78, %76 : vector<4x32xf32>
    %c0_31 = arith.constant 0 : index
    %c0_32 = arith.constant 0 : index
    %c0_33 = arith.constant 0 : index
    %80 = vector.load %arg4[%c0_31, %c0_32, %c0_33] : memref<4x8x32xf32, #tpu.memory_space<vmem>>, vector<4x1x32xf32>
    %81 = vector.shape_cast %80 : vector<4x1x32xf32> to vector<4x32xf32>
    %82 = vector.shape_cast %79 : vector<4x32xf32> to vector<4x1x32xf32>
    tpu.vector_store %arg4[%c0_31, %c0_32, %c0_33], %82 {strides = array<i32>} : memref<4x8x32xf32, #tpu.memory_space<vmem>>, vector<4x1x32xf32>,
    %c0_34 = arith.constant 0 : index
    %c1 = arith.constant 1 : index
    %c0_35 = arith.constant 0 : index
    %83 = vector.load %arg6[%c0_34, %c1, %c0_35] : memref<4x8x96xf32, #tpu.memory_space<vmem>>, vector<4x1x96xf32>
    %84 = vector.shape_cast %83 : vector<4x1x96xf32> to vector<4x96xf32>
    %85 = vector.extract_strided_slice %84 {offsets = [0, 0], sizes = [4, 32], strides = [1, 1]} : vector<4x96xf32> to vector<4x32xf32>
    %86 = vector.extract_strided_slice %84 {offsets = [0, 32], sizes = [4, 32], strides = [1, 1]} : vector<4x96xf32> to vector<4x32xf32>
    %87 = vector.extract_strided_slice %84 {offsets = [0, 64], sizes = [4, 32], strides = [1, 1]} : vector<4x96xf32> to vector<4x32xf32>
    %88 = arith.mulf %85, %78 : vector<4x32xf32>
    %89 = arith.addf %88, %86 : vector<4x32xf32>
    %90 = arith.mulf %89, %87 : vector<4x32xf32>
    %c0_36 = arith.constant 0 : index
    %c1_37 = arith.constant 1 : index
    %c0_38 = arith.constant 0 : index
    %91 = vector.load %arg4[%c0_36, %c1_37, %c0_38] : memref<4x8x32xf32, #tpu.memory_space<vmem>>, vector<4x1x32xf32>
    %92 = vector.shape_cast %91 : vector<4x1x32xf32> to vector<4x32xf32>
    %93 = vector.shape_cast %90 : vector<4x32xf32> to vector<4x1x32xf32>
    tpu.vector_store %arg4[%c0_36, %c1_37, %c0_38], %93 {strides = array<i32>} : memref<4x8x32xf32, #tpu.memory_space<vmem>>, vector<4x1x32xf32>,
    %c0_39 = arith.constant 0 : index
    %c2 = arith.constant 2 : index
    %c0_40 = arith.constant 0 : index
    %94 = vector.load %arg6[%c0_39, %c2, %c0_40] : memref<4x8x96xf32, #tpu.memory_space<vmem>>, vector<4x1x96xf32>
    %95 = vector.shape_cast %94 : vector<4x1x96xf32> to vector<4x96xf32>
    %96 = vector.extract_strided_slice %95 {offsets = [0, 0], sizes = [4, 32], strides = [1, 1]} : vector<4x96xf32> to vector<4x32xf32>
    %97 = vector.extract_strided_slice %95 {offsets = [0, 32], sizes = [4, 32], strides = [1, 1]} : vector<4x96xf32> to vector<4x32xf32>
    %98 = vector.extract_strided_slice %95 {offsets = [0, 64], sizes = [4, 32], strides = [1, 1]} : vector<4x96xf32> to vector<4x32xf32>
    %99 = arith.mulf %96, %89 : vector<4x32xf32>
    %100 = arith.addf %99, %97 : vector<4x32xf32>
    %101 = arith.mulf %100, %98 : vector<4x32xf32>
    %c0_41 = arith.constant 0 : index
    %c2_42 = arith.constant 2 : index
    %c0_43 = arith.constant 0 : index
    %102 = vector.load %arg4[%c0_41, %c2_42, %c0_43] : memref<4x8x32xf32, #tpu.memory_space<vmem>>, vector<4x1x32xf32>
    %103 = vector.shape_cast %102 : vector<4x1x32xf32> to vector<4x32xf32>
    %104 = vector.shape_cast %101 : vector<4x32xf32> to vector<4x1x32xf32>
    tpu.vector_store %arg4[%c0_41, %c2_42, %c0_43], %104 {strides = array<i32>} : memref<4x8x32xf32, #tpu.memory_space<vmem>>, vector<4x1x32xf32>,
    %c0_44 = arith.constant 0 : index
    %c3 = arith.constant 3 : index
    %c0_45 = arith.constant 0 : index
    %105 = vector.load %arg6[%c0_44, %c3, %c0_45] : memref<4x8x96xf32, #tpu.memory_space<vmem>>, vector<4x1x96xf32>
    %106 = vector.shape_cast %105 : vector<4x1x96xf32> to vector<4x96xf32>
    %107 = vector.extract_strided_slice %106 {offsets = [0, 0], sizes = [4, 32], strides = [1, 1]} : vector<4x96xf32> to vector<4x32xf32>
    %108 = vector.extract_strided_slice %106 {offsets = [0, 32], sizes = [4, 32], strides = [1, 1]} : vector<4x96xf32> to vector<4x32xf32>
    %109 = vector.extract_strided_slice %106 {offsets = [0, 64], sizes = [4, 32], strides = [1, 1]} : vector<4x96xf32> to vector<4x32xf32>
    %110 = arith.mulf %107, %100 : vector<4x32xf32>
    %111 = arith.addf %110, %108 : vector<4x32xf32>
    %112 = arith.mulf %111, %109 : vector<4x32xf32>
    %c0_46 = arith.constant 0 : index
    %c3_47 = arith.constant 3 : index
    %c0_48 = arith.constant 0 : index
    %113 = vector.load %arg4[%c0_46, %c3_47, %c0_48] : memref<4x8x32xf32, #tpu.memory_space<vmem>>, vector<4x1x32xf32>
    %114 = vector.shape_cast %113 : vector<4x1x32xf32> to vector<4x32xf32>
    %115 = vector.shape_cast %112 : vector<4x32xf32> to vector<4x1x32xf32>
    tpu.vector_store %arg4[%c0_46, %c3_47, %c0_48], %115 {strides = array<i32>} : memref<4x8x32xf32, #tpu.memory_space<vmem>>, vector<4x1x32xf32>,
    %c0_49 = arith.constant 0 : index
    %c4 = arith.constant 4 : index
    %c0_50 = arith.constant 0 : index
    %116 = vector.load %arg6[%c0_49, %c4, %c0_50] : memref<4x8x96xf32, #tpu.memory_space<vmem>>, vector<4x1x96xf32>
    %117 = vector.shape_cast %116 : vector<4x1x96xf32> to vector<4x96xf32>
    %118 = vector.extract_strided_slice %117 {offsets = [0, 0], sizes = [4, 32], strides = [1, 1]} : vector<4x96xf32> to vector<4x32xf32>
    %119 = vector.extract_strided_slice %117 {offsets = [0, 32], sizes = [4, 32], strides = [1, 1]} : vector<4x96xf32> to vector<4x32xf32>
    %120 = vector.extract_strided_slice %117 {offsets = [0, 64], sizes = [4, 32], strides = [1, 1]} : vector<4x96xf32> to vector<4x32xf32>
    %121 = arith.mulf %118, %111 : vector<4x32xf32>
    %122 = arith.addf %121, %119 : vector<4x32xf32>
    %123 = arith.mulf %122, %120 : vector<4x32xf32>
    %c0_51 = arith.constant 0 : index
    %c4_52 = arith.constant 4 : index
    %c0_53 = arith.constant 0 : index
    %124 = vector.load %arg4[%c0_51, %c4_52, %c0_53] : memref<4x8x32xf32, #tpu.memory_space<vmem>>, vector<4x1x32xf32>
    %125 = vector.shape_cast %124 : vector<4x1x32xf32> to vector<4x32xf32>
    %126 = vector.shape_cast %123 : vector<4x32xf32> to vector<4x1x32xf32>
    tpu.vector_store %arg4[%c0_51, %c4_52, %c0_53], %126 {strides = array<i32>} : memref<4x8x32xf32, #tpu.memory_space<vmem>>, vector<4x1x32xf32>,
    %c0_54 = arith.constant 0 : index
    %c5 = arith.constant 5 : index
    %c0_55 = arith.constant 0 : index
    %127 = vector.load %arg6[%c0_54, %c5, %c0_55] : memref<4x8x96xf32, #tpu.memory_space<vmem>>, vector<4x1x96xf32>
    %128 = vector.shape_cast %127 : vector<4x1x96xf32> to vector<4x96xf32>
    %129 = vector.extract_strided_slice %128 {offsets = [0, 0], sizes = [4, 32], strides = [1, 1]} : vector<4x96xf32> to vector<4x32xf32>
    %130 = vector.extract_strided_slice %128 {offsets = [0, 32], sizes = [4, 32], strides = [1, 1]} : vector<4x96xf32> to vector<4x32xf32>
    %131 = vector.extract_strided_slice %128 {offsets = [0, 64], sizes = [4, 32], strides = [1, 1]} : vector<4x96xf32> to vector<4x32xf32>
    %132 = arith.mulf %129, %122 : vector<4x32xf32>
    %133 = arith.addf %132, %130 : vector<4x32xf32>
    %134 = arith.mulf %133, %131 : vector<4x32xf32>
    %c0_56 = arith.constant 0 : index
    %c5_57 = arith.constant 5 : index
    %c0_58 = arith.constant 0 : index
    %135 = vector.load %arg4[%c0_56, %c5_57, %c0_58] : memref<4x8x32xf32, #tpu.memory_space<vmem>>, vector<4x1x32xf32>
    %136 = vector.shape_cast %135 : vector<4x1x32xf32> to vector<4x32xf32>
    %137 = vector.shape_cast %134 : vector<4x32xf32> to vector<4x1x32xf32>
    tpu.vector_store %arg4[%c0_56, %c5_57, %c0_58], %137 {strides = array<i32>} : memref<4x8x32xf32, #tpu.memory_space<vmem>>, vector<4x1x32xf32>,
    %c0_59 = arith.constant 0 : index
    %c6 = arith.constant 6 : index
    %c0_60 = arith.constant 0 : index
    %138 = vector.load %arg6[%c0_59, %c6, %c0_60] : memref<4x8x96xf32, #tpu.memory_space<vmem>>, vector<4x1x96xf32>
    %139 = vector.shape_cast %138 : vector<4x1x96xf32> to vector<4x96xf32>
    %140 = vector.extract_strided_slice %139 {offsets = [0, 0], sizes = [4, 32], strides = [1, 1]} : vector<4x96xf32> to vector<4x32xf32>
    %141 = vector.extract_strided_slice %139 {offsets = [0, 32], sizes = [4, 32], strides = [1, 1]} : vector<4x96xf32> to vector<4x32xf32>
    %142 = vector.extract_strided_slice %139 {offsets = [0, 64], sizes = [4, 32], strides = [1, 1]} : vector<4x96xf32> to vector<4x32xf32>
    %143 = arith.mulf %140, %133 : vector<4x32xf32>
    %144 = arith.addf %143, %141 : vector<4x32xf32>
    %145 = arith.mulf %144, %142 : vector<4x32xf32>
    %c0_61 = arith.constant 0 : index
    %c6_62 = arith.constant 6 : index
    %c0_63 = arith.constant 0 : index
    %146 = vector.load %arg4[%c0_61, %c6_62, %c0_63] : memref<4x8x32xf32, #tpu.memory_space<vmem>>, vector<4x1x32xf32>
    %147 = vector.shape_cast %146 : vector<4x1x32xf32> to vector<4x32xf32>
    %148 = vector.shape_cast %145 : vector<4x32xf32> to vector<4x1x32xf32>
    tpu.vector_store %arg4[%c0_61, %c6_62, %c0_63], %148 {strides = array<i32>} : memref<4x8x32xf32, #tpu.memory_space<vmem>>, vector<4x1x32xf32>,
    %c0_64 = arith.constant 0 : index
    %c7 = arith.constant 7 : index
    %c0_65 = arith.constant 0 : index
    %149 = vector.load %arg6[%c0_64, %c7, %c0_65] : memref<4x8x96xf32, #tpu.memory_space<vmem>>, vector<4x1x96xf32>
    %150 = vector.shape_cast %149 : vector<4x1x96xf32> to vector<4x96xf32>
    %151 = vector.extract_strided_slice %150 {offsets = [0, 0], sizes = [4, 32], strides = [1, 1]} : vector<4x96xf32> to vector<4x32xf32>
    %152 = vector.extract_strided_slice %150 {offsets = [0, 32], sizes = [4, 32], strides = [1, 1]} : vector<4x96xf32> to vector<4x32xf32>
    %153 = vector.extract_strided_slice %150 {offsets = [0, 64], sizes = [4, 32], strides = [1, 1]} : vector<4x96xf32> to vector<4x32xf32>
    %154 = arith.mulf %151, %144 : vector<4x32xf32>
    %155 = arith.addf %154, %152 : vector<4x32xf32>
    %156 = arith.mulf %155, %153 : vector<4x32xf32>
    %c0_66 = arith.constant 0 : index
    %c7_67 = arith.constant 7 : index
    %c0_68 = arith.constant 0 : index
    %157 = vector.load %arg4[%c0_66, %c7_67, %c0_68] : memref<4x8x32xf32, #tpu.memory_space<vmem>>, vector<4x1x32xf32>
    %158 = vector.shape_cast %157 : vector<4x1x32xf32> to vector<4x32xf32>
    %159 = vector.shape_cast %156 : vector<4x32xf32> to vector<4x1x32xf32>
    tpu.vector_store %arg4[%c0_66, %c7_67, %c0_68], %159 {strides = array<i32>} : memref<4x8x32xf32, #tpu.memory_space<vmem>>, vector<4x1x32xf32>,
    %c0_69 = arith.constant 0 : index
    %c0_70 = arith.constant 0 : index
    %160 = vector.load %arg5[%c0_69, %c0_70] : memref<4x32xf32, #tpu.memory_space<vmem>>, vector<4x32xf32>
    tpu.vector_store %arg5[%c0_69, %c0_70], %155 {strides = array<i32>} : memref<4x32xf32, #tpu.memory_space<vmem>>, vector<4x32xf32>,
    return
  }
  func.func @transform_0(%arg0: i32) -> (i32, i32, i32) {
    %c0_i32 = arith.constant 0 : i32
    %c0_i32_0 = arith.constant 0 : i32
    %c0_i32_1 = arith.constant 0 : i32
    return %c0_i32, %arg0, %c0_i32_0 : i32, i32, i32
  }
  func.func @transform_1(%arg0: i32) -> (i32, i32) {
    %c0_i32 = arith.constant 0 : i32
    %c0_i32_0 = arith.constant 0 : i32
    %c0_i32_1 = arith.constant 0 : i32
    return %c0_i32, %c0_i32_0 : i32, i32
  }
  func.func @transform_2(%arg0: i32) -> (i32, i32) {
    %c0_i32 = arith.constant 0 : i32
    %c0_i32_0 = arith.constant 0 : i32
    %c0_i32_1 = arith.constant 0 : i32
    return %c0_i32, %c0_i32_0 : i32, i32
  }
  func.func @transform_3(%arg0: i32) -> (i32, i32, i32) {
    %c0_i32 = arith.constant 0 : i32
    %c0_i32_0 = arith.constant 0 : i32
    %c0_i32_1 = arith.constant 0 : i32
    return %c0_i32, %arg0, %c0_i32_0 : i32, i32, i32
  }
}

</mosaic_0001>

<llo_original>
// kernel: mlgru_layer_forward.1
$region0: #{mlgru_layer_forward.1}
  #allocation0 [shape = 'u32[]', space=smem, size = 0x4, offset = 0x4, fixed_abs, tag = 'smem constant byte address 0x4 - core index']
  #allocation1 [shape = 'u32[144,128]{1,0:T(1,128)}', space=vmem, size = 0x12000, scoped, tag = 'internal scratch']
  #allocation2 [shape = 'f32[4,32]{1,0:T(4,128)}', space=vmem, size = 0x800, scoped, tag = 'scratch operand']
  #allocation3 [shape = 'f32[4,8,96]{2,1,0:T(8,128)}', space=vmem, size = 0x4000, scoped, tag = 'scratch operand']
  %s0 = inlined_call_operand.vmem [shape: f32[4,8,32], index: 0, kind: input, shape index: {}]
  %s1 = inlined_call_operand.vmem [shape: bf16[32,96], index: 1, kind: input, shape index: {}]
  %s2 = inlined_call_operand.vmem [shape: f32[1,96], index: 2, kind: input, shape index: {}]
  %s3 = inlined_call_operand.hbm [shape: f32[4,8,32], index: 3, kind: output, shape index: {}]
  %s4 = sld [smem:[#allocation0]]
  $region26: #{mlgru_layer_forward.1} parent=0
    _
  %s6 = ssub.s32 1, %s4
  %s7 = scalar_select 0, %s6, %s4
  $region1: #{mlgru_layer_forward.1} parent=0
    #allocation4 [shape = 'u8[16384]{0}', space=vmem, size = 0x4000, scoped, tag = 'output window, operand 0, single buffered']
    #allocation5 [shape = 's32[1]{0}', space=sflag, size = 0x4, scoped, tag = 'scoped memory for mlgru_layer_forward.1']
    %8 = vsyncpa [#allocation5], 0
    // Predicated region
    $region2: #{mlgru_layer_forward.1} parent=1 // pred_check
      _
    $region3: #{mlgru_layer_forward.1} parent=1 // pred_check_branch
      %10 = sbr.rel (0) target = $region5
    $region4: #{mlgru_layer_forward.1} parent=1 // pred_region
      _
    $region5: #{mlgru_layer_forward.1} parent=1 // pred_fallthru
      _
    // Predicated region
    $region6: #{mlgru_layer_forward.1} parent=1 // pred_check
      _
    $region7: #{mlgru_layer_forward.1} parent=1 // pred_check_branch
      %12 = sbr.rel (0) target = $region9
    $region8: #{mlgru_layer_forward.1} parent=1 // pred_region
      _
    $region9: #{mlgru_layer_forward.1} parent=1 // pred_fallthru
      _
    // Predicated region
    $region10: #{mlgru_layer_forward.1} parent=1 // pred_check
      _
    $region11: #{mlgru_layer_forward.1} parent=1 // pred_check_branch
      %14 = sbr.rel (0) target = $region13
    $region12: #{mlgru_layer_forward.1} parent=1 // pred_region
      _
    $region13: #{mlgru_layer_forward.1} parent=1 // pred_fallthru
      _
    %p16 = scmp.eq.s32.totalorder 0, 0
    // Predicated region
    $region14: #{mlgru_layer_forward.1} parent=1 // pred_check
      %p17 = pneg %p16
    $region15: #{mlgru_layer_forward.1} parent=1 // pred_check_branch
      %19 = sbr.rel (%p17) target = $region17
    $region16: #{mlgru_layer_forward.1} parent=1 // pred_region
      %vm20 = vcmask 257024
      %21 = vst.msk [vmem:[#allocation2] sm:$0xf] %vm20, 0.0
    $region17: #{mlgru_layer_forward.1} parent=1 // pred_fallthru
      _
    %v22 = vld [vmem:[%s0] sm:$0xff]
    %v23 = vld [vmem:[%s0 + $0x8] sm:$0xff]
    %v24 = vld [vmem:[%s0 + $0x10] sm:$0xff]
    %v25 = vld [vmem:[%s0 + $0x18] sm:$0xff]
    %vm26 = vcmask 261120
    %v27 = vsel %vm26, %v22, 0.0
    %28 = vadd.xlane.f32.xlu0 %v27
    %v29 = vpop.xlane.xlu0 %28
    %v30 = vsel %vm26, %v23, 0.0
    %31 = vadd.xlane.f32.xlu0 %v30
    %v32 = vpop.xlane.xlu0 %31
    %v33 = vsel %vm26, %v24, 0.0
    %34 = vadd.xlane.f32.xlu0 %v33
    %v35 = vpop.xlane.xlu0 %34
    %v36 = vsel %vm26, %v25, 0.0
    %37 = vadd.xlane.f32.xlu0 %v36
    %v38 = vpop.xlane.xlu0 %37
    %v39 = vrcp.pop 32.0
    %v40 = vmul.f32 %v29, %v39
    %v41 = vmul.f32 %v32, %v39
    %v42 = vmul.f32 %v35, %v39
    %v43 = vmul.f32 %v38, %v39
    %v44 = vsub.f32 %v22, %v40
    %v45 = vsub.f32 %v23, %v41
    %v46 = vsub.f32 %v24, %v42
    %v47 = vsub.f32 %v25, %v43
    %v48 = vmul.f32 %v44, %v44
    %v49 = vmul.f32 %v45, %v45
    %v50 = vmul.f32 %v46, %v46
    %v51 = vmul.f32 %v47, %v47
    %v52 = vsel %vm26, %v48, 0.0
    %53 = vadd.xlane.f32.xlu0 %v52
    %v54 = vpop.xlane.xlu0 %53
    %v55 = vsel %vm26, %v49, 0.0
    %56 = vadd.xlane.f32.xlu0 %v55
    %v57 = vpop.xlane.xlu0 %56
    %v58 = vsel %vm26, %v50, 0.0
    %59 = vadd.xlane.f32.xlu0 %v58
    %v60 = vpop.xlane.xlu0 %59
    %v61 = vsel %vm26, %v51, 0.0
    %62 = vadd.xlane.f32.xlu0 %v61
    %v63 = vpop.xlane.xlu0 %62
    %v64 = vmul.f32 %v54, %v39
    %v65 = vmul.f32 %v57, %v39
    %v66 = vmul.f32 %v60, %v39
    %v67 = vmul.f32 %v63, %v39
    %v68 = vadd.f32 %v64, 1e-08
    %v69 = vadd.f32 %v65, 1e-08
    %v70 = vadd.f32 %v66, 1e-08
    %v71 = vadd.f32 %v67, 1e-08
    %v72 = vmax.f32 %v68, 1e-10
    %v73 = vmax.f32 %v69, 1e-10
    %v74 = vmax.f32 %v70, 1e-10
    %v75 = vmax.f32 %v71, 1e-10
    %v76 = vrsqrt.pop %v72
    %v77 = vrsqrt.pop %v73
    %v78 = vrsqrt.pop %v74
    %v79 = vrsqrt.pop %v75
    %v80 = vmul.f32 %v76, %v44
    %v81 = vmul.f32 %v77, %v45
    %v82 = vmul.f32 %v78, %v46
    %v83 = vmul.f32 %v79, %v47
    %vm84 = vcmp.ne.f32.partialorder %v80, %v80
    %vm85 = vcmp.ne.f32.partialorder %v81, %v81
    %vm86 = vcmp.ne.f32.partialorder %v82, %v82
    %vm87 = vcmp.ne.f32.partialorder %v83, %v83
    %v88 = vsel %vm84, 0.0, %v80
    %v89 = vsel %vm85, 0.0, %v81
    %v90 = vsel %vm86, 0.0, %v82
    %v91 = vsel %vm87, 0.0, %v83
    %v92 = vand.u32 2147483647, %v88
    %v93 = vand.u32 2147483647, %v89
    %v94 = vand.u32 2147483647, %v90
    %v95 = vand.u32 2147483647, %v91
    %v96 = vsel %vm26, %v92, -inf
    %97 = vmax.xlane.f32.xlu0 %v96
    %v98 = vpop.xlane.xlu0 %97
    %v99 = vsel %vm26, %v93, -inf
    %100 = vmax.xlane.f32.xlu0 %v99
    %v101 = vpop.xlane.xlu0 %100
    %v102 = vsel %vm26, %v94, -inf
    %103 = vmax.xlane.f32.xlu0 %v102
    %v104 = vpop.xlane.xlu0 %103
    %v105 = vsel %vm26, %v95, -inf
    %106 = vmax.xlane.f32.xlu0 %v105
    %v107 = vpop.xlane.xlu0 %106
    %v108 = vmax.f32 %v98, %v101
    %v109 = vmax.f32 %v104, %v107
    %v110 = vmax.f32 %v108, %v109
    %vm111 = vcmp.eq.f32.partialorder %v110, 0.0
    %vm112 = vcmp.ne.f32.partialorder %v110, %v110
    %vm113 = vmor %vm111, %vm112
    %v114 = vrcp.pop 127.0
    %v115 = vmul.f32 %v110, %v114
    %v116 = vsel %vm113, 1.0, %v115
    %v117 = vrcp.pop %v116
    %v118 = vmul.f32 %v88, %v117
    %v119 = vmul.f32 %v89, %v117
    %v120 = vmul.f32 %v90, %v117
    %v121 = vmul.f32 %v91, %v117
    %v122 = vround.ne.pseudo %v118
    %v123 = vround.ne.pseudo %v119
    %v124 = vround.ne.pseudo %v120
    %v125 = vround.ne.pseudo %v121
    %v126 = vmax.f32 %v122, -128.0
    %v127 = vmax.f32 %v123, -128.0
    %v128 = vmax.f32 %v124, -128.0
    %v129 = vmax.f32 %v125, -128.0
    %v130 = vmin.f32 %v126, 127.0
    %v131 = vmin.f32 %v127, 127.0
    %v132 = vmin.f32 %v128, 127.0
    %v133 = vmin.f32 %v129, 127.0
    %v134 = vpack.c.bf16 %v130, %v130
    %v135 = vpack.c.bf16 %v131, %v131
    %v136 = vpack.c.bf16 %v132, %v132
    %v137 = vpack.c.bf16 %v133, %v133
    %v138 = vld [vmem:[%s1] sm:$0xf]
    %v139 = vld [vmem:[%s1 + $0x4] sm:$0xf]
    %v140 = vld [vmem:[%s1 + $0x8] sm:$0xf]
    %v141 = vld [vmem:[%s1 + $0xc] sm:$0xf]
    %v146 = vunpack.c.l.b16 %v134
    %v147 = vunpack.c.l.b16 %v135
    %v148 = vunpack.c.l.b16 %v136
    %v149 = vunpack.c.l.b16 %v137
    %v150 = vpack.c.b16 %v147, %v146
    %v151 = vpack.c.b16 %v149, %v148
    %v156 = vunpack.c.l.b16 %v138
    %v157 = vunpack.c.l.b16 %v139
    %v158 = vunpack.c.l.b16 %v140
    %v159 = vunpack.c.l.b16 %v141
    %v160 = vpack.c.b16 %v157, %v156
    %v161 = vpack.c.b16 %v159, %v158
    %v165 = vsel %vm26, %v150, 0
    %v168 = vsel %vm26, %v151, 0
    %170 = vmatprep.subr.bf16.mxu0 0
    %171 = vmatpush1.bf16.msra.mxu0 %v160
    %172 = vmatprep.subr.bf16.mxu0 0
    %173 = vmatpush1.bf16.msra.mxu0 %v161
    %174 = vmatprep.subr.bf16.mxu0 0
    %175 = vmatpush1.bf16.msra.mxu0 0
    %176 = vmatprep.subr.bf16.mxu0 0
    %177 = vmatpush1.bf16.msra.mxu0 0
    %178 = vmatprep.subr.bf16.mxu0 0
    %179 = vmatpush1.bf16.msra.mxu0 0
    %180 = vmatprep.subr.bf16.mxu0 0
    %181 = vmatpush1.bf16.msra.mxu0 0
    %182 = vmatprep.subr.bf16.mxu0 0
    %183 = vmatpush1.bf16.msra.mxu0 0
    %184 = vmatprep.subr.bf16.mxu0 0
    %185 = vmatpush1.bf16.msra.mxu0 0
    %186 = vmatprep.subr.bf16.mxu0 0
    %187 = vmatpush1.bf16.msra.mxu0 0
    %188 = vmatprep.subr.bf16.mxu0 0
    %189 = vmatpush1.bf16.msra.mxu0 0
    %190 = vmatprep.subr.bf16.mxu0 0
    %191 = vmatpush1.bf16.msra.mxu0 0
    %192 = vmatprep.subr.bf16.mxu0 0
    %193 = vmatpush1.bf16.msra.mxu0 0
    %194 = vmatprep.subr.bf16.mxu0 0
    %195 = vmatpush1.bf16.msra.mxu0 0
    %196 = vmatprep.subr.bf16.mxu0 0
    %197 = vmatpush1.bf16.msra.mxu0 0
    %198 = vmatprep.subr.bf16.mxu0 0
    %199 = vmatpush1.bf16.msra.mxu0 0
    %200 = vmatprep.subr.bf16.mxu0 0
    %201 = vmatpush1.bf16.msra.mxu0 0
    %202 = vmatprep.mubr.bf16.mxu0 0
    %203 = vmatmul.mubr.bf16.gmra.mrb[0].mxu0 %v165
    %v204 = vpop.f32.mrb[0].mxu0
    %v205 = vadd.f32 0.0, %v204
    %v206 = vpop.f32.mrb[0].mxu0
    %v207 = vpop.f32.mrb[0].mxu0
    %v208 = vadd.f32 0.0, %v207
    %v209 = vpop.f32.mrb[0].mxu0
    %210 = vmatprep.mubr.bf16.mxu0 0
    %211 = vmatmul.mubr.bf16.gmra.mrb[0].mxu0 %v168
    %v212 = vpop.f32.mrb[0].mxu0
    %v213 = vadd.f32 0.0, %v212
    %v214 = vpop.f32.mrb[0].mxu0
    %v215 = vpop.f32.mrb[0].mxu0
    %v216 = vadd.f32 0.0, %v215
    %v217 = vpop.f32.mrb[0].mxu0
    %218 = vdwg.mxu0
    %v219 = vmul.f32 %v205, %v116
    %v220 = vmul.f32 %v208, %v116
    %v221 = vmul.f32 %v213, %v116
    %v222 = vmul.f32 %v216, %v116
    %v223 = vld [vmem:[%s2] sm:$0x1]
    %v225 = vlaneseq
    %v226 = vshrl.u32 %v225, 7
    %v227 = vsub.s32 0, %v226
    %v228 = vrot.slane %v223, %v227
    %v230 = vadd.f32 %v219, %v228
    %v231 = vadd.f32 %v220, %v228
    %v232 = vadd.f32 %v221, %v228
    %v233 = vadd.f32 %v222, %v228
    %v234 = vxor.u32 %v230, 2147483648
    %v235 = vxor.u32 %v231, 2147483648
    %v236 = vxor.u32 %v232, 2147483648
    %v237 = vxor.u32 %v233, 2147483648
    %v238 = vmul.f32 %v234, 1.442695
    %v239 = vpow.pop %v238
    %v240 = vmul.f32 %v235, 1.442695
    %v241 = vpow.pop %v240
    %v242 = vmul.f32 %v236, 1.442695
    %v243 = vpow.pop %v242
    %v244 = vmul.f32 %v237, 1.442695
    %v245 = vpow.pop %v244
    %v246 = vadd.f32 %v239, 1.0
    %v247 = vadd.f32 %v241, 1.0
    %v248 = vadd.f32 %v243, 1.0
    %v249 = vadd.f32 %v245, 1.0
    %v250 = vrcp.pop %v246
    %v251 = vmul.f32 1.0, %v250
    %v252 = vrcp.pop %v247
    %v253 = vmul.f32 1.0, %v252
    %v254 = vrcp.pop %v248
    %v255 = vmul.f32 1.0, %v254
    %v256 = vrcp.pop %v249
    %v257 = vmul.f32 1.0, %v256
    %v258 = vsub.f32 1.0, %v251
    %v259 = vsub.f32 1.0, %v253
    %v260 = vsub.f32 1.0, %v255
    %v261 = vsub.f32 1.0, %v257
    %v262 = vmul.f32 %v230, %v251
    %v263 = vmul.f32 %v231, %v253
    %v264 = vmul.f32 %v232, %v255
    %v265 = vmul.f32 %v233, %v257
    %270 = vrot.lane.b32.xlu0 %v262, 96
    %v271 = vpop.permute.xlu0 %270
    %272 = vrot.lane.b32.xlu0 %v263, 96
    %v273 = vpop.permute.xlu0 %272
    %274 = vrot.lane.b32.xlu0 %v264, 96
    %v275 = vpop.permute.xlu0 %274
    %276 = vrot.lane.b32.xlu0 %v265, 96
    %v277 = vpop.permute.xlu0 %276
    %v282 = vmul.f32 %v258, %v271
    %v283 = vmul.f32 %v259, %v273
    %v284 = vmul.f32 %v260, %v275
    %v285 = vmul.f32 %v261, %v277
    %290 = vrot.lane.b32.xlu0 %v282, 32
    %v291 = vpop.permute.xlu0 %290
    %292 = vrot.lane.b32.xlu0 %v283, 32
    %v293 = vpop.permute.xlu0 %292
    %294 = vrot.lane.b32.xlu0 %v284, 32
    %v295 = vpop.permute.xlu0 %294
    %296 = vrot.lane.b32.xlu0 %v285, 32
    %v297 = vpop.permute.xlu0 %296
    %v302 = vsel %vm26, %v251, %v291
    %v303 = vsel %vm26, %v253, %v293
    %v304 = vsel %vm26, %v255, %v295
    %v305 = vsel %vm26, %v257, %v297
    %vm306 = vcmask 523264
    %v307 = vsel %vm306, %v302, %v251
    %v308 = vsel %vm306, %v303, %v253
    %v309 = vsel %vm306, %v304, %v255
    %v310 = vsel %vm306, %v305, %v257
    %vm311 = vcmask 785408
    %312 = vst.msk [vmem:[#allocation3] sm:$0xff] %vm311, %v307
    %313 = vst.msk [vmem:[#allocation3 + $0x8] sm:$0xff] %vm311, %v308
    %314 = vst.msk [vmem:[#allocation3 + $0x10] sm:$0xff] %vm311, %v309
    %315 = vst.msk [vmem:[#allocation3 + $0x18] sm:$0xff] %vm311, %v310
    %v316 = vld [vmem:[#allocation2] sm:$0xf]
    %v317 = vld [vmem:[#allocation3] sm:$0x1]
    %v318 = vld [vmem:[#allocation3 + $0x8] sm:$0x1]
    %v319 = vld [vmem:[#allocation3 + $0x10] sm:$0x1]
    %v320 = vld [vmem:[#allocation3 + $0x18] sm:$0x1]
    %v322 = vrot.slane %v316, 1
    %v323 = vrot.slane %v316, 2
    %v324 = vrot.slane %v316, 3
    %v329 = vmul.f32 %v317, %v316
    %v330 = vmul.f32 %v318, %v322
    %v331 = vmul.f32 %v319, %v323
    %v332 = vmul.f32 %v320, %v324
    %337 = vrot.lane.b32.xlu0 %v317, 96
    %v338 = vpop.permute.xlu0 %337
    %339 = vrot.lane.b32.xlu0 %v318, 96
    %v340 = vpop.permute.xlu0 %339
    %341 = vrot.lane.b32.xlu0 %v319, 96
    %v342 = vpop.permute.xlu0 %341
    %343 = vrot.lane.b32.xlu0 %v320, 96
    %v344 = vpop.permute.xlu0 %343
    %v349 = vadd.f32 %v329, %v338
    %v350 = vadd.f32 %v330, %v340
    %v351 = vadd.f32 %v331, %v342
    %v352 = vadd.f32 %v332, %v344
    %353 = vrot.lane.b32.xlu0 %v317, 64
    %v354 = vpop.permute.xlu0 %353
    %355 = vrot.lane.b32.xlu0 %v318, 64
    %v356 = vpop.permute.xlu0 %355
    %357 = vrot.lane.b32.xlu0 %v319, 64
    %v358 = vpop.permute.xlu0 %357
    %359 = vrot.lane.b32.xlu0 %v320, 64
    %v360 = vpop.permute.xlu0 %359
    %v365 = vmul.f32 %v349, %v354
    %v366 = vmul.f32 %v350, %v356
    %v367 = vmul.f32 %v351, %v358
    %v368 = vmul.f32 %v352, %v360
    %vm369 = vcmask 253952
    %370 = vst.msk [vmem:[#allocation4] sm:$0x1] %vm369, %v365
    %371 = vst.msk [vmem:[#allocation4 + $0x8] sm:$0x1] %vm369, %v366
    %372 = vst.msk [vmem:[#allocation4 + $0x10] sm:$0x1] %vm369, %v367
    %373 = vst.msk [vmem:[#allocation4 + $0x18] sm:$0x1] %vm369, %v368
    %v374 = vld [vmem:[#allocation3 + $0x1] sm:$0x1]
    %v375 = vld [vmem:[#allocation3 + $0x9] sm:$0x1]
    %v376 = vld [vmem:[#allocation3 + $0x11] sm:$0x1]
    %v377 = vld [vmem:[#allocation3 + $0x19] sm:$0x1]
    %v378 = vmul.f32 %v374, %v349
    %v379 = vmul.f32 %v375, %v350
    %v380 = vmul.f32 %v376, %v351
    %v381 = vmul.f32 %v377, %v352
    %386 = vrot.lane.b32.xlu0 %v374, 96
    %v387 = vpop.permute.xlu0 %386
    %388 = vrot.lane.b32.xlu0 %v375, 96
    %v389 = vpop.permute.xlu0 %388
    %390 = vrot.lane.b32.xlu0 %v376, 96
    %v391 = vpop.permute.xlu0 %390
    %392 = vrot.lane.b32.xlu0 %v377, 96
    %v393 = vpop.permute.xlu0 %392
    %v398 = vadd.f32 %v378, %v387
    %v399 = vadd.f32 %v379, %v389
    %v400 = vadd.f32 %v380, %v391
    %v401 = vadd.f32 %v381, %v393
    %402 = vrot.lane.b32.xlu0 %v374, 64
    %v403 = vpop.permute.xlu0 %402
    %404 = vrot.lane.b32.xlu0 %v375, 64
    %v405 = vpop.permute.xlu0 %404
    %406 = vrot.lane.b32.xlu0 %v376, 64
    %v407 = vpop.permute.xlu0 %406
    %408 = vrot.lane.b32.xlu0 %v377, 64
    %v409 = vpop.permute.xlu0 %408
    %v414 = vmul.f32 %v398, %v403
    %v415 = vmul.f32 %v399, %v405
    %v416 = vmul.f32 %v400, %v407
    %v417 = vmul.f32 %v401, %v409
    %418 = vst.msk [vmem:[#allocation4 + $0x1] sm:$0x1] %vm369, %v414
    %419 = vst.msk [vmem:[#allocation4 + $0x9] sm:$0x1] %vm369, %v415
    %420 = vst.msk [vmem:[#allocation4 + $0x11] sm:$0x1] %vm369, %v416
    %421 = vst.msk [vmem:[#allocation4 + $0x19] sm:$0x1] %vm369, %v417
    %v422 = vld [vmem:[#allocation3 + $0x2] sm:$0x1]
    %v423 = vld [vmem:[#allocation3 + $0xa] sm:$0x1]
    %v424 = vld [vmem:[#allocation3 + $0x12] sm:$0x1]
    %v425 = vld [vmem:[#allocation3 + $0x1a] sm:$0x1]
    %v426 = vmul.f32 %v422, %v398
    %v427 = vmul.f32 %v423, %v399
    %v428 = vmul.f32 %v424, %v400
    %v429 = vmul.f32 %v425, %v401
    %434 = vrot.lane.b32.xlu0 %v422, 96
    %v435 = vpop.permute.xlu0 %434
    %436 = vrot.lane.b32.xlu0 %v423, 96
    %v437 = vpop.permute.xlu0 %436
    %438 = vrot.lane.b32.xlu0 %v424, 96
    %v439 = vpop.permute.xlu0 %438
    %440 = vrot.lane.b32.xlu0 %v425, 96
    %v441 = vpop.permute.xlu0 %440
    %v446 = vadd.f32 %v426, %v435
    %v447 = vadd.f32 %v427, %v437
    %v448 = vadd.f32 %v428, %v439
    %v449 = vadd.f32 %v429, %v441
    %450 = vrot.lane.b32.xlu0 %v422, 64
    %v451 = vpop.permute.xlu0 %450
    %452 = vrot.lane.b32.xlu0 %v423, 64
    %v453 = vpop.permute.xlu0 %452
    %454 = vrot.lane.b32.xlu0 %v424, 64
    %v455 = vpop.permute.xlu0 %454
    %456 = vrot.lane.b32.xlu0 %v425, 64
    %v457 = vpop.permute.xlu0 %456
    %v462 = vmul.f32 %v446, %v451
    %v463 = vmul.f32 %v447, %v453
    %v464 = vmul.f32 %v448, %v455
    %v465 = vmul.f32 %v449, %v457
    %466 = vst.msk [vmem:[#allocation4 + $0x2] sm:$0x1] %vm369, %v462
    %467 = vst.msk [vmem:[#allocation4 + $0xa] sm:$0x1] %vm369, %v463
    %468 = vst.msk [vmem:[#allocation4 + $0x12] sm:$0x1] %vm369, %v464
    %469 = vst.msk [vmem:[#allocation4 + $0x1a] sm:$0x1] %vm369, %v465
    %v470 = vld [vmem:[#allocation3 + $0x3] sm:$0x1]
    %v471 = vld [vmem:[#allocation3 + $0xb] sm:$0x1]
    %v472 = vld [vmem:[#allocation3 + $0x13] sm:$0x1]
    %v473 = vld [vmem:[#allocation3 + $0x1b] sm:$0x1]
    %v474 = vmul.f32 %v470, %v446
    %v475 = vmul.f32 %v471, %v447
    %v476 = vmul.f32 %v472, %v448
    %v477 = vmul.f32 %v473, %v449
    %482 = vrot.lane.b32.xlu0 %v470, 96
    %v483 = vpop.permute.xlu0 %482
    %484 = vrot.lane.b32.xlu0 %v471, 96
    %v485 = vpop.permute.xlu0 %484
    %486 = vrot.lane.b32.xlu0 %v472, 96
    %v487 = vpop.permute.xlu0 %486
    %488 = vrot.lane.b32.xlu0 %v473, 96
    %v489 = vpop.permute.xlu0 %488
    %v494 = vadd.f32 %v474, %v483
    %v495 = vadd.f32 %v475, %v485
    %v496 = vadd.f32 %v476, %v487
    %v497 = vadd.f32 %v477, %v489
    %498 = vrot.lane.b32.xlu0 %v470, 64
    %v499 = vpop.permute.xlu0 %498
    %500 = vrot.lane.b32.xlu0 %v471, 64
    %v501 = vpop.permute.xlu0 %500
    %502 = vrot.lane.b32.xlu0 %v472, 64
    %v503 = vpop.permute.xlu0 %502
    %504 = vrot.lane.b32.xlu0 %v473, 64
    %v505 = vpop.permute.xlu0 %504
    %v510 = vmul.f32 %v494, %v499
    %v511 = vmul.f32 %v495, %v501
    %v512 = vmul.f32 %v496, %v503
    %v513 = vmul.f32 %v497, %v505
    %514 = vst.msk [vmem:[#allocation4 + $0x3] sm:$0x1] %vm369, %v510
    %515 = vst.msk [vmem:[#allocation4 + $0xb] sm:$0x1] %vm369, %v511
    %516 = vst.msk [vmem:[#allocation4 + $0x13] sm:$0x1] %vm369, %v512
    %517 = vst.msk [vmem:[#allocation4 + $0x1b] sm:$0x1] %vm369, %v513
    %v518 = vld [vmem:[#allocation3 + $0x4] sm:$0x1]
    %v519 = vld [vmem:[#allocation3 + $0xc] sm:$0x1]
    %v520 = vld [vmem:[#allocation3 + $0x14] sm:$0x1]
    %v521 = vld [vmem:[#allocation3 + $0x1c] sm:$0x1]
    %v522 = vmul.f32 %v518, %v494
    %v523 = vmul.f32 %v519, %v495
    %v524 = vmul.f32 %v520, %v496
    %v525 = vmul.f32 %v521, %v497
    %530 = vrot.lane.b32.xlu0 %v518, 96
    %v531 = vpop.permute.xlu0 %530
    %532 = vrot.lane.b32.xlu0 %v519, 96
    %v533 = vpop.permute.xlu0 %532
    %534 = vrot.lane.b32.xlu0 %v520, 96
    %v535 = vpop.permute.xlu0 %534
    %536 = vrot.lane.b32.xlu0 %v521, 96
    %v537 = vpop.permute.xlu0 %536
    %v542 = vadd.f32 %v522, %v531
    %v543 = vadd.f32 %v523, %v533
    %v544 = vadd.f32 %v524, %v535
    %v545 = vadd.f32 %v525, %v537
    %546 = vrot.lane.b32.xlu0 %v518, 64
    %v547 = vpop.permute.xlu0 %546
    %548 = vrot.lane.b32.xlu0 %v519, 64
    %v549 = vpop.permute.xlu0 %548
    %550 = vrot.lane.b32.xlu0 %v520, 64
    %v551 = vpop.permute.xlu0 %550
    %552 = vrot.lane.b32.xlu0 %v521, 64
    %v553 = vpop.permute.xlu0 %552
    %v558 = vmul.f32 %v542, %v547
    %v559 = vmul.f32 %v543, %v549
    %v560 = vmul.f32 %v544, %v551
    %v561 = vmul.f32 %v545, %v553
    %562 = vst.msk [vmem:[#allocation4 + $0x4] sm:$0x1] %vm369, %v558
    %563 = vst.msk [vmem:[#allocation4 + $0xc] sm:$0x1] %vm369, %v559
    %564 = vst.msk [vmem:[#allocation4 + $0x14] sm:$0x1] %vm369, %v560
    %565 = vst.msk [vmem:[#allocation4 + $0x1c] sm:$0x1] %vm369, %v561
    %v566 = vld [vmem:[#allocation3 + $0x5] sm:$0x1]
    %v567 = vld [vmem:[#allocation3 + $0xd] sm:$0x1]
    %v568 = vld [vmem:[#allocation3 + $0x15] sm:$0x1]
    %v569 = vld [vmem:[#allocation3 + $0x1d] sm:$0x1]
    %v570 = vmul.f32 %v566, %v542
    %v571 = vmul.f32 %v567, %v543
    %v572 = vmul.f32 %v568, %v544
    %v573 = vmul.f32 %v569, %v545
    %578 = vrot.lane.b32.xlu0 %v566, 96
    %v579 = vpop.permute.xlu0 %578
    %580 = vrot.lane.b32.xlu0 %v567, 96
    %v581 = vpop.permute.xlu0 %580
    %582 = vrot.lane.b32.xlu0 %v568, 96
    %v583 = vpop.permute.xlu0 %582
    %584 = vrot.lane.b32.xlu0 %v569, 96
    %v585 = vpop.permute.xlu0 %584
    %v590 = vadd.f32 %v570, %v579
    %v591 = vadd.f32 %v571, %v581
    %v592 = vadd.f32 %v572, %v583
    %v593 = vadd.f32 %v573, %v585
    %594 = vrot.lane.b32.xlu0 %v566, 64
    %v595 = vpop.permute.xlu0 %594
    %596 = vrot.lane.b32.xlu0 %v567, 64
    %v597 = vpop.permute.xlu0 %596
    %598 = vrot.lane.b32.xlu0 %v568, 64
    %v599 = vpop.permute.xlu0 %598
    %600 = vrot.lane.b32.xlu0 %v569, 64
    %v601 = vpop.permute.xlu0 %600
    %v606 = vmul.f32 %v590, %v595
    %v607 = vmul.f32 %v591, %v597
    %v608 = vmul.f32 %v592, %v599
    %v609 = vmul.f32 %v593, %v601
    %610 = vst.msk [vmem:[#allocation4 + $0x5] sm:$0x1] %vm369, %v606
    %611 = vst.msk [vmem:[#allocation4 + $0xd] sm:$0x1] %vm369, %v607
    %612 = vst.msk [vmem:[#allocation4 + $0x15] sm:$0x1] %vm369, %v608
    %613 = vst.msk [vmem:[#allocation4 + $0x1d] sm:$0x1] %vm369, %v609
    %v614 = vld [vmem:[#allocation3 + $0x6] sm:$0x1]
    %v615 = vld [vmem:[#allocation3 + $0xe] sm:$0x1]
    %v616 = vld [vmem:[#allocation3 + $0x16] sm:$0x1]
    %v617 = vld [vmem:[#allocation3 + $0x1e] sm:$0x1]
    %v618 = vmul.f32 %v614, %v590
    %v619 = vmul.f32 %v615, %v591
    %v620 = vmul.f32 %v616, %v592
    %v621 = vmul.f32 %v617, %v593
    %626 = vrot.lane.b32.xlu0 %v614, 96
    %v627 = vpop.permute.xlu0 %626
    %628 = vrot.lane.b32.xlu0 %v615, 96
    %v629 = vpop.permute.xlu0 %628
    %630 = vrot.lane.b32.xlu0 %v616, 96
    %v631 = vpop.permute.xlu0 %630
    %632 = vrot.lane.b32.xlu0 %v617, 96
    %v633 = vpop.permute.xlu0 %632
    %v638 = vadd.f32 %v618, %v627
    %v639 = vadd.f32 %v619, %v629
    %v640 = vadd.f32 %v620, %v631
    %v641 = vadd.f32 %v621, %v633
    %642 = vrot.lane.b32.xlu0 %v614, 64
    %v643 = vpop.permute.xlu0 %642
    %644 = vrot.lane.b32.xlu0 %v615, 64
    %v645 = vpop.permute.xlu0 %644
    %646 = vrot.lane.b32.xlu0 %v616, 64
    %v647 = vpop.permute.xlu0 %646
    %648 = vrot.lane.b32.xlu0 %v617, 64
    %v649 = vpop.permute.xlu0 %648
    %v654 = vmul.f32 %v638, %v643
    %v655 = vmul.f32 %v639, %v645
    %v656 = vmul.f32 %v640, %v647
    %v657 = vmul.f32 %v641, %v649
    %658 = vst.msk [vmem:[#allocation4 + $0x6] sm:$0x1] %vm369, %v654
    %659 = vst.msk [vmem:[#allocation4 + $0xe] sm:$0x1] %vm369, %v655
    %660 = vst.msk [vmem:[#allocation4 + $0x16] sm:$0x1] %vm369, %v656
    %661 = vst.msk [vmem:[#allocation4 + $0x1e] sm:$0x1] %vm369, %v657
    %v662 = vld [vmem:[#allocation3 + $0x7] sm:$0x1]
    %v663 = vld [vmem:[#allocation3 + $0xf] sm:$0x1]
    %v664 = vld [vmem:[#allocation3 + $0x17] sm:$0x1]
    %v665 = vld [vmem:[#allocation3 + $0x1f] sm:$0x1]
    %v666 = vmul.f32 %v662, %v638
    %v667 = vmul.f32 %v663, %v639
    %v668 = vmul.f32 %v664, %v640
    %v669 = vmul.f32 %v665, %v641
    %674 = vrot.lane.b32.xlu0 %v662, 96
    %v675 = vpop.permute.xlu0 %674
    %676 = vrot.lane.b32.xlu0 %v663, 96
    %v677 = vpop.permute.xlu0 %676
    %678 = vrot.lane.b32.xlu0 %v664, 96
    %v679 = vpop.permute.xlu0 %678
    %680 = vrot.lane.b32.xlu0 %v665, 96
    %v681 = vpop.permute.xlu0 %680
    %v686 = vadd.f32 %v666, %v675
    %v687 = vadd.f32 %v667, %v677
    %v688 = vadd.f32 %v668, %v679
    %v689 = vadd.f32 %v669, %v681
    %690 = vrot.lane.b32.xlu0 %v662, 64
    %v691 = vpop.permute.xlu0 %690
    %692 = vrot.lane.b32.xlu0 %v663, 64
    %v693 = vpop.permute.xlu0 %692
    %694 = vrot.lane.b32.xlu0 %v664, 64
    %v695 = vpop.permute.xlu0 %694
    %696 = vrot.lane.b32.xlu0 %v665, 64
    %v697 = vpop.permute.xlu0 %696
    %v702 = vmul.f32 %v686, %v691
    %v703 = vmul.f32 %v687, %v693
    %v704 = vmul.f32 %v688, %v695
    %v705 = vmul.f32 %v689, %v697
    %706 = vst.msk [vmem:[#allocation4 + $0x7] sm:$0x1] %vm369, %v702
    %707 = vst.msk [vmem:[#allocation4 + $0xf] sm:$0x1] %vm369, %v703
    %708 = vst.msk [vmem:[#allocation4 + $0x17] sm:$0x1] %vm369, %v704
    %709 = vst.msk [vmem:[#allocation4 + $0x1f] sm:$0x1] %vm369, %v705
    %v714 = vrot.slane %v687, 7
    %vm715 = vcmask 1041409
    %v716 = vsel %vm715, %v714, %v686
    %v717 = vrot.slane %v688, 6
    %vm718 = vcmask 1042434
    %v719 = vsel %vm718, %v717, %v716
    %v720 = vrot.slane %v689, 5
    %vm721 = vcmask 1043459
    %v722 = vsel %vm721, %v720, %v719
    %vm724 = vcmask 257024
    %725 = vst.msk [vmem:[#allocation2] sm:$0xf] %vm724, %v722
    // Predicated region
    $region18: #{mlgru_layer_forward.1} parent=1 // pred_check
      _
    $region19: #{mlgru_layer_forward.1} parent=1 // pred_check_branch
      %727 = sbr.rel (0) target = $region21
    $region20: #{mlgru_layer_forward.1} parent=1 // pred_region
      %s729 = ssub.s32 512, 512
      %730 = vsyncadd [#allocation5], %s729
      %s731 = sshll.u32 [#allocation4], 4
      %s732 = int_to_ptr.vmem [resolvable:$true] %s731
      %737 = dma.vmem_to_hbm [thread:$0]  %s732, 512, %s3, [#allocation5], 128, 128, 8
    $region21: #{mlgru_layer_forward.1} parent=1 // pred_fallthru
      _
    // Predicated region
    $region22: #{mlgru_layer_forward.1} parent=1 // pred_check
      _
    $region23: #{mlgru_layer_forward.1} parent=1 // pred_check_branch
      %739 = sbr.rel (0) target = $region25
    $region24: #{mlgru_layer_forward.1} parent=1 // pred_region
      %740 = dma.done [#allocation5], 512
    $region25: #{mlgru_layer_forward.1} parent=1 // pred_fallthru
      _
    %741 = vsyncpa [#allocation5], 1

</llo_original>
